<compile_context>
chip_gen: v7x
topology: tpu7x:2x2x1
jax: 0.10.0
libtpu: 0.0.40
codegen_flags: <defaults>
</compile_context>

<pallas_src>
import math
import functools

import jax
import jax.numpy as jnp
from jax.experimental import pallas as pl
from jax.experimental.pallas import tpu as pltpu


def _round_up(x: int, m: int) -> int:
    return ((x + m - 1) // m) * m


def _flow_kernel(alpha_ref, beta_ref, zt_ref, z0t_ref, out_ref, *,
                 num_transforms: int, dim: int):
    """K radial transforms + standard-Normal log-prob for one batch tile.

    zt_ref : (D, tb)  transposed input tile (batch on lanes)
    z0t_ref: (D, K)   transposed transform centers (loaded once, sliced in regs)
    out_ref: (1, tb)  lane-dense log-prob row
    """
    z = zt_ref[...].astype(jnp.float32)            # (D, tb)
    z0_all = z0t_ref[...].astype(jnp.float32)      # (D, K) -- single load, hoisted
    log_det = jnp.zeros((1, z.shape[1]), jnp.float32)   # (1, tb), lane-dense

    # K is small and static -> unrolled Python loop (LLO sees straight-line code).
    # TODO(synk): for large K switch to lax.fori_loop(..., unroll=True) with
    # alpha/beta indexed from SMEM to bound vreg live ranges.
    for k in range(num_transforms):
        z0 = z0_all[:, k:k + 1]                    # (D, 1), lane-broadcast below
        alpha = alpha_ref[k]                       # scalar read from SMEM
        beta = beta_ref[k]                         # scalar read from SMEM

        diff = z - z0                                                   # (D, tb)
        r = jnp.sqrt(jnp.sum(diff * diff, axis=0, keepdims=True))       # (1, tb) XLU
        h = pl.reciprocal(alpha + r, approx=False)                      # (1, tb) EUP
        bh = beta * h                                                   # (1, tb)

        z = z + bh * diff                          # radial transform (sublane bcast)
        # log|det J_k| = (D-1)*log(1+bh) + log(1 + alpha*beta*h^2)
        log_det = (log_det
                   + (dim - 1) * jnp.log(1.0 + bh)
                   + jnp.log(1.0 + alpha * beta * h * h))

    const = dim * math.log(2.0 * math.pi)
    norm = jnp.sum(z * z, axis=0, keepdims=True)   # (1, tb) sublane reduce
    out_ref[...] = -0.5 * (const + norm) + log_det  # lane-dense store


def normalizing_flow_log_prob(z, z0, alpha, beta, *, block_b=1024):
    """z: [*, D]; z0: [K, D]; alpha, beta: [K] -> [*] f32 log-probabilities."""
    batch_shape = z.shape[:-1]
    D = z.shape[-1]
    K = z0.shape[0]

    zf = jnp.reshape(z, (-1, D)).astype(jnp.float32)   # [B, D]
    B = zf.shape[0]

    # Lane-dense batch tile: multiple of 128, capped at block_b, never larger
    # than the (padded) batch.  Double-buffered VMEM per tile is ~2*D*tb*4
    # bytes, far below even v7x's 64 MiB for realistic D.
    eff_block = min(_round_up(block_b, 128), _round_up(B, 128))
    eff_block = max(eff_block, 128)
    B_pad = _round_up(B, eff_block)
    num_tiles = B_pad // eff_block

    # Transpose so the batch dimension rides the 128 lanes; zero-pad the lane
    # axis (padded columns are computed then discarded).  XLA fuses pad+copy.
    z_t = jnp.pad(zf.T, ((0, 0), (0, B_pad - B)))      # [D, B_pad]
    z0_t = z0.astype(jnp.float32).T                    # [D, K]
    alpha = alpha.astype(jnp.float32)
    beta = beta.astype(jnp.float32)

    kernel = functools.partial(_flow_kernel, num_transforms=K, dim=D)

    # Advisory cost hint: HBM-bound elementwise flow (helps XLA scheduling).
    cost = pl.CostEstimate(
        flops=int(B_pad) * (D * (6 * K + 2) + 8 * K + 4),
        transcendentals=int(B_pad) * K * 4,            # sqrt, rcp, 2x log per k
        bytes_accessed=int(B_pad) * D * 4 + D * K * 4 + int(B_pad) * 4,
    )

    out = pl.pallas_call(
        kernel,
        out_shape=jax.ShapeDtypeStruct((1, B_pad), jnp.float32),
        grid_spec=pltpu.PrefetchScalarGridSpec(
            num_scalar_prefetch=0,
            grid=(num_tiles,),
            in_specs=[
                pl.BlockSpec(memory_space=pltpu.MemorySpace.SMEM),    # alpha (K,)
                pl.BlockSpec(memory_space=pltpu.MemorySpace.SMEM),    # beta  (K,)
                pl.BlockSpec((D, eff_block), lambda i: (0, i)),       # z^T tile
                pl.BlockSpec((D, K), lambda i: (0, 0)),               # z0^T (all)
            ],
            out_specs=pl.BlockSpec((1, eff_block), lambda i: (0, i)),  # lane-dense
        ),
        compiler_params=pltpu.CompilerParams(
            dimension_semantics=("parallel",)),
        cost_estimate=cost,
    )(alpha, beta, z_t, z0_t)

    return out[0, :B].reshape(batch_shape)


def reference_log_prob(z, z0, alpha, beta):
    """Pure-JAX mirror of the PyTorch NormalizingFlow.forward with radial transforms."""
    B, D = z.shape
    log_det_sum = jnp.zeros((B,), jnp.float32)
    for k in range(z0.shape[0]):
        diff = z - z0[k]
        r = jnp.sqrt(jnp.sum(diff * diff, axis=-1, keepdims=True))
        h = 1.0 / (alpha[k] + r)
        bh = beta[k] * h
        z = z + bh * diff
        ld = (D - 1) * jnp.log(1.0 + bh) + jnp.log(1.0 + bh - beta[k] * r * h * h)
        log_det_sum = log_det_sum + ld[:, 0]
    const = D * math.log(2.0 * math.pi)
    norm = jnp.sum(z * z, axis=-1)     # einsum('...ij,...ij->...i', z, z)
    return -0.5 * (const + norm) + log_det_sum


if __name__ == "__main__":
    # Small demo shapes: batch not divisible by the tile, to exercise padding
    # and a multi-step (parallel) grid.
    B, D, K = 300, 16, 4                     # batch, flow dim, number of transforms

    key = jax.random.PRNGKey(0)
    k_z, k_z0, k_a, k_b = jax.random.split(key, 4)

    z = jax.random.normal(k_z, (B, D), dtype=jnp.float32)

    # Deterministic synthetic parameters for the K radial transforms.
    z0 = 0.1 * jax.random.normal(k_z0, (K, D), dtype=jnp.float32)
    alpha_prime = jax.random.normal(k_a, (K,), dtype=jnp.float32)
    beta_prime = jax.random.normal(k_b, (K,), dtype=jnp.float32)
    alpha = jax.nn.softplus(alpha_prime)                       # > 0
    beta = -alpha + jax.nn.softplus(beta_prime)                # >= -alpha (invertible)

    out = jax.block_until_ready(
        normalizing_flow_log_prob(z, z0, alpha, beta, block_b=128))
    ref = jax.block_until_ready(reference_log_prob(z, z0, alpha, beta))

    assert out.shape == (B,)
    assert jnp.allclose(out, ref, rtol=1e-4, atol=1e-4), (out, ref)

    # Leading-batch-dims path ([*, dim] like the PyTorch module).
    out3 = jax.block_until_ready(
        normalizing_flow_log_prob(z.reshape(3, 100, D), z0, alpha, beta, block_b=128))
    assert out3.shape == (3, 100)
    assert jnp.allclose(out3.reshape(-1), ref, rtol=1e-4, atol=1e-4)

    print("KERNEL_OK")
</pallas_src>

<mosaic_0001>
module attributes {stable_mosaic.version = 11 : i64} {
  func.func @_flow_kernel(%arg0: i32, %arg1: memref<4xf32, #tpu.memory_space<smem>>, %arg2: memref<4xf32, #tpu.memory_space<smem>>, %arg3: memref<16x128xf32, #tpu.memory_space<vmem>>, %arg4: memref<16x4xf32, #tpu.memory_space<vmem>>, %arg5: memref<1x128xf32, #tpu.memory_space<vmem>>) attributes {dimension_semantics = [#tpu.dimension_semantics<parallel>], iteration_bounds = array<i64: 3>, scalar_prefetch = 0 : i64, scratch_operands = 0 : i64, tpu.core_type = #tpu.core_type<tc>, window_params = [{transform_indices = @transform_0, window_bounds = array<i64: 4>}, {transform_indices = @transform_1, window_bounds = array<i64: 4>}, {transform_indices = @transform_2, window_bounds = array<i64: 16, 128>}, {pipeline_mode = #tpu.pipeline_mode<synchronous>, transform_indices = @transform_3, window_bounds = array<i64: 16, 4>}, {transform_indices = @transform_4, window_bounds = array<i64: 1, 128>}]} {
    %c0 = arith.constant 0 : index
    %c0_0 = arith.constant 0 : index
    %0 = vector.load %arg3[%c0, %c0_0] : memref<16x128xf32, #tpu.memory_space<vmem>>, vector<16x128xf32>
    %c0_1 = arith.constant 0 : index
    %c0_2 = arith.constant 0 : index
    %1 = vector.load %arg4[%c0_1, %c0_2] : memref<16x4xf32, #tpu.memory_space<vmem>>, vector<16x4xf32>
    %cst = arith.constant 0.000000e+00 : f32
    %2 = vector.broadcast %cst : f32 to vector<1x128xf32>
    %3 = vector.extract_strided_slice %1 {offsets = [0, 0], sizes = [16, 1], strides = [1, 1]} : vector<16x4xf32> to vector<16x1xf32>
    %c0_3 = arith.constant 0 : index
    %4 = memref.load %arg1[%c0_3] : memref<4xf32, #tpu.memory_space<smem>>
    %c0_4 = arith.constant 0 : index
    %5 = memref.load %arg2[%c0_4] : memref<4xf32, #tpu.memory_space<smem>>
    %6 = vector.broadcast %3 : vector<16x1xf32> to vector<16x128xf32>
    %7 = arith.subf %0, %6 : vector<16x128xf32>
    %8 = arith.mulf %7, %7 : vector<16x128xf32>
    %cst_5 = arith.constant dense<0.000000e+00> : vector<128xf32>
    %9 = vector.multi_reduction <add>, %8, %cst_5 [0] : vector<16x128xf32> to vector<128xf32>
    %10 = vector.shape_cast %9 : vector<128xf32> to vector<1x128xf32>
    %11 = math.sqrt %10 : vector<1x128xf32>
    %12 = vector.broadcast %4 : f32 to vector<1x128xf32>
    %13 = arith.addf %12, %11 : vector<1x128xf32>
    %14 = tpu.reciprocal %13 : vector<1x128xf32> -> vector<1x128xf32>
    %15 = vector.broadcast %5 : f32 to vector<1x128xf32>
    %16 = arith.mulf %15, %14 : vector<1x128xf32>
    %17 = vector.broadcast %16 : vector<1x128xf32> to vector<16x128xf32>
    %18 = arith.mulf %17, %7 : vector<16x128xf32>
    %19 = arith.addf %0, %18 : vector<16x128xf32>
    %cst_6 = arith.constant 1.000000e+00 : f32
    %20 = vector.broadcast %cst_6 : f32 to vector<1x128xf32>
    %21 = arith.addf %20, %16 : vector<1x128xf32>
    %22 = math.log %21 : vector<1x128xf32>
    %cst_7 = arith.constant 1.500000e+01 : f32
    %23 = vector.broadcast %cst_7 : f32 to vector<1x128xf32>
    %24 = arith.mulf %23, %22 : vector<1x128xf32>
    %25 = arith.addf %2, %24 : vector<1x128xf32>
    %26 = arith.mulf %4, %5 : f32
    %27 = vector.broadcast %26 : f32 to vector<1x128xf32>
    %28 = arith.mulf %27, %14 : vector<1x128xf32>
    %29 = arith.mulf %28, %14 : vector<1x128xf32>
    %cst_8 = arith.constant 1.000000e+00 : f32
    %30 = vector.broadcast %cst_8 : f32 to vector<1x128xf32>
    %31 = arith.addf %30, %29 : vector<1x128xf32>
    %32 = math.log %31 : vector<1x128xf32>
    %33 = arith.addf %25, %32 : vector<1x128xf32>
    %34 = vector.extract_strided_slice %1 {offsets = [0, 1], sizes = [16, 1], strides = [1, 1]} : vector<16x4xf32> to vector<16x1xf32>
    %c1 = arith.constant 1 : index
    %35 = memref.load %arg1[%c1] : memref<4xf32, #tpu.memory_space<smem>>
    %c1_9 = arith.constant 1 : index
    %36 = memref.load %arg2[%c1_9] : memref<4xf32, #tpu.memory_space<smem>>
    %37 = vector.broadcast %34 : vector<16x1xf32> to vector<16x128xf32>
    %38 = arith.subf %19, %37 : vector<16x128xf32>
    %39 = arith.mulf %38, %38 : vector<16x128xf32>
    %cst_10 = arith.constant dense<0.000000e+00> : vector<128xf32>
    %40 = vector.multi_reduction <add>, %39, %cst_10 [0] : vector<16x128xf32> to vector<128xf32>
    %41 = vector.shape_cast %40 : vector<128xf32> to vector<1x128xf32>
    %42 = math.sqrt %41 : vector<1x128xf32>
    %43 = vector.broadcast %35 : f32 to vector<1x128xf32>
    %44 = arith.addf %43, %42 : vector<1x128xf32>
    %45 = tpu.reciprocal %44 : vector<1x128xf32> -> vector<1x128xf32>
    %46 = vector.broadcast %36 : f32 to vector<1x128xf32>
    %47 = arith.mulf %46, %45 : vector<1x128xf32>
    %48 = vector.broadcast %47 : vector<1x128xf32> to vector<16x128xf32>
    %49 = arith.mulf %48, %38 : vector<16x128xf32>
    %50 = arith.addf %19, %49 : vector<16x128xf32>
    %cst_11 = arith.constant 1.000000e+00 : f32
    %51 = vector.broadcast %cst_11 : f32 to vector<1x128xf32>
    %52 = arith.addf %51, %47 : vector<1x128xf32>
    %53 = math.log %52 : vector<1x128xf32>
    %cst_12 = arith.constant 1.500000e+01 : f32
    %54 = vector.broadcast %cst_12 : f32 to vector<1x128xf32>
    %55 = arith.mulf %54, %53 : vector<1x128xf32>
    %56 = arith.addf %33, %55 : vector<1x128xf32>
    %57 = arith.mulf %35, %36 : f32
    %58 = vector.broadcast %57 : f32 to vector<1x128xf32>
    %59 = arith.mulf %58, %45 : vector<1x128xf32>
    %60 = arith.mulf %59, %45 : vector<1x128xf32>
    %cst_13 = arith.constant 1.000000e+00 : f32
    %61 = vector.broadcast %cst_13 : f32 to vector<1x128xf32>
    %62 = arith.addf %61, %60 : vector<1x128xf32>
    %63 = math.log %62 : vector<1x128xf32>
    %64 = arith.addf %56, %63 : vector<1x128xf32>
    %65 = vector.extract_strided_slice %1 {offsets = [0, 2], sizes = [16, 1], strides = [1, 1]} : vector<16x4xf32> to vector<16x1xf32>
    %c2 = arith.constant 2 : index
    %66 = memref.load %arg1[%c2] : memref<4xf32, #tpu.memory_space<smem>>
    %c2_14 = arith.constant 2 : index
    %67 = memref.load %arg2[%c2_14] : memref<4xf32, #tpu.memory_space<smem>>
    %68 = vector.broadcast %65 : vector<16x1xf32> to vector<16x128xf32>
    %69 = arith.subf %50, %68 : vector<16x128xf32>
    %70 = arith.mulf %69, %69 : vector<16x128xf32>
    %cst_15 = arith.constant dense<0.000000e+00> : vector<128xf32>
    %71 = vector.multi_reduction <add>, %70, %cst_15 [0] : vector<16x128xf32> to vector<128xf32>
    %72 = vector.shape_cast %71 : vector<128xf32> to vector<1x128xf32>
    %73 = math.sqrt %72 : vector<1x128xf32>
    %74 = vector.broadcast %66 : f32 to vector<1x128xf32>
    %75 = arith.addf %74, %73 : vector<1x128xf32>
    %76 = tpu.reciprocal %75 : vector<1x128xf32> -> vector<1x128xf32>
    %77 = vector.broadcast %67 : f32 to vector<1x128xf32>
    %78 = arith.mulf %77, %76 : vector<1x128xf32>
    %79 = vector.broadcast %78 : vector<1x128xf32> to vector<16x128xf32>
    %80 = arith.mulf %79, %69 : vector<16x128xf32>
    %81 = arith.addf %50, %80 : vector<16x128xf32>
    %cst_16 = arith.constant 1.000000e+00 : f32
    %82 = vector.broadcast %cst_16 : f32 to vector<1x128xf32>
    %83 = arith.addf %82, %78 : vector<1x128xf32>
    %84 = math.log %83 : vector<1x128xf32>
    %cst_17 = arith.constant 1.500000e+01 : f32
    %85 = vector.broadcast %cst_17 : f32 to vector<1x128xf32>
    %86 = arith.mulf %85, %84 : vector<1x128xf32>
    %87 = arith.addf %64, %86 : vector<1x128xf32>
    %88 = arith.mulf %66, %67 : f32
    %89 = vector.broadcast %88 : f32 to vector<1x128xf32>
    %90 = arith.mulf %89, %76 : vector<1x128xf32>
    %91 = arith.mulf %90, %76 : vector<1x128xf32>
    %cst_18 = arith.constant 1.000000e+00 : f32
    %92 = vector.broadcast %cst_18 : f32 to vector<1x128xf32>
    %93 = arith.addf %92, %91 : vector<1x128xf32>
    %94 = math.log %93 : vector<1x128xf32>
    %95 = arith.addf %87, %94 : vector<1x128xf32>
    %96 = vector.extract_strided_slice %1 {offsets = [0, 3], sizes = [16, 1], strides = [1, 1]} : vector<16x4xf32> to vector<16x1xf32>
    %c3 = arith.constant 3 : index
    %97 = memref.load %arg1[%c3] : memref<4xf32, #tpu.memory_space<smem>>
    %c3_19 = arith.constant 3 : index
    %98 = memref.load %arg2[%c3_19] : memref<4xf32, #tpu.memory_space<smem>>
    %99 = vector.broadcast %96 : vector<16x1xf32> to vector<16x128xf32>
    %100 = arith.subf %81, %99 : vector<16x128xf32>
    %101 = arith.mulf %100, %100 : vector<16x128xf32>
    %cst_20 = arith.constant dense<0.000000e+00> : vector<128xf32>
    %102 = vector.multi_reduction <add>, %101, %cst_20 [0] : vector<16x128xf32> to vector<128xf32>
    %103 = vector.shape_cast %102 : vector<128xf32> to vector<1x128xf32>
    %104 = math.sqrt %103 : vector<1x128xf32>
    %105 = vector.broadcast %97 : f32 to vector<1x128xf32>
    %106 = arith.addf %105, %104 : vector<1x128xf32>
    %107 = tpu.reciprocal %106 : vector<1x128xf32> -> vector<1x128xf32>
    %108 = vector.broadcast %98 : f32 to vector<1x128xf32>
    %109 = arith.mulf %108, %107 : vector<1x128xf32>
    %110 = vector.broadcast %109 : vector<1x128xf32> to vector<16x128xf32>
    %111 = arith.mulf %110, %100 : vector<16x128xf32>
    %112 = arith.addf %81, %111 : vector<16x128xf32>
    %cst_21 = arith.constant 1.000000e+00 : f32
    %113 = vector.broadcast %cst_21 : f32 to vector<1x128xf32>
    %114 = arith.addf %113, %109 : vector<1x128xf32>
    %115 = math.log %114 : vector<1x128xf32>
    %cst_22 = arith.constant 1.500000e+01 : f32
    %116 = vector.broadcast %cst_22 : f32 to vector<1x128xf32>
    %117 = arith.mulf %116, %115 : vector<1x128xf32>
    %118 = arith.addf %95, %117 : vector<1x128xf32>
    %119 = arith.mulf %97, %98 : f32
    %120 = vector.broadcast %119 : f32 to vector<1x128xf32>
    %121 = arith.mulf %120, %107 : vector<1x128xf32>
    %122 = arith.mulf %121, %107 : vector<1x128xf32>
    %cst_23 = arith.constant 1.000000e+00 : f32
    %123 = vector.broadcast %cst_23 : f32 to vector<1x128xf32>
    %124 = arith.addf %123, %122 : vector<1x128xf32>
    %125 = math.log %124 : vector<1x128xf32>
    %126 = arith.addf %118, %125 : vector<1x128xf32>
    %127 = arith.mulf %112, %112 : vector<16x128xf32>
    %cst_24 = arith.constant dense<0.000000e+00> : vector<128xf32>
    %128 = vector.multi_reduction <add>, %127, %cst_24 [0] : vector<16x128xf32> to vector<128xf32>
    %129 = vector.shape_cast %128 : vector<128xf32> to vector<1x128xf32>
    %cst_25 = arith.constant 29.4060326 : f32
    %130 = vector.broadcast %cst_25 : f32 to vector<1x128xf32>
    %131 = arith.addf %130, %129 : vector<1x128xf32>
    %cst_26 = arith.constant -5.000000e-01 : f32
    %132 = vector.broadcast %cst_26 : f32 to vector<1x128xf32>
    %133 = arith.mulf %132, %131 : vector<1x128xf32>
    %134 = arith.addf %133, %126 : vector<1x128xf32>
    %c0_27 = arith.constant 0 : index
    %c0_28 = arith.constant 0 : index
    %135 = vector.load %arg5[%c0_27, %c0_28] : memref<1x128xf32, #tpu.memory_space<vmem>>, vector<1x128xf32>
    tpu.vector_store %arg5[%c0_27, %c0_28], %134 {strides = array<i32>} : memref<1x128xf32, #tpu.memory_space<vmem>>, vector<1x128xf32>,
    return
  }
  func.func @transform_0(%arg0: i32) -> i32 {
    %c0_i32 = arith.constant 0 : i32
    %c0_i32_0 = arith.constant 0 : i32
    return %c0_i32 : i32
  }
  func.func @transform_1(%arg0: i32) -> i32 {
    %c0_i32 = arith.constant 0 : i32
    %c0_i32_0 = arith.constant 0 : i32
    return %c0_i32 : i32
  }
  func.func @transform_2(%arg0: i32) -> (i32, i32) {
    %c0_i32 = arith.constant 0 : i32
    %c0_i32_0 = arith.constant 0 : i32
    return %c0_i32, %arg0 : i32, i32
  }
  func.func @transform_3(%arg0: i32) -> (i32, i32) {
    %c0_i32 = arith.constant 0 : i32
    %c0_i32_0 = arith.constant 0 : i32
    %c0_i32_1 = arith.constant 0 : i32
    return %c0_i32, %c0_i32_0 : i32, i32
  }
  func.func @transform_4(%arg0: i32) -> (i32, i32) {
    %c0_i32 = arith.constant 0 : i32
    %c0_i32_0 = arith.constant 0 : i32
    return %c0_i32, %arg0 : i32, i32
  }
}

</mosaic_0001>

<llo_original>
// kernel: tpu_custom_call.1
$region0: #{tpu_custom_call.1}
  #allocation0 [shape = 'u32[]', space=smem, size = 0x4, offset = 0x4, fixed_abs, tag = 'smem constant byte address 0x4 - core index']
  #allocation1 [shape = 'u32[144,128]{1,0:T(1,128)}', space=vmem, size = 0x12000, scoped, tag = 'internal scratch']
  %s0 = inlined_call_operand.vmem [shape: f32[4], index: 0, kind: input, shape index: {}]
  %s1 = inlined_call_operand.vmem [shape: f32[4], index: 1, kind: input, shape index: {}]
  %s2 = inlined_call_operand.hbm [shape: f32[16,384], index: 2, kind: input, shape index: {}]
  %s3 = inlined_call_operand.vmem [shape: f32[16,4], index: 3, kind: input, shape index: {}]
  %s4 = inlined_call_operand.hbm [shape: f32[1,384], index: 4, kind: output, shape index: {}]
  %s5 = sld [smem:[#allocation0]]
  $region61: #{tpu_custom_call.1} parent=0
    _
  %s7 = ssub.s32 1, %s5
  %s8 = scalar_select 0, %s7, %s5
  $region1: #{tpu_custom_call.1} parent=0
    #allocation2 [shape = 'u8[512]{0}', space=smem, size = 0x200, scoped, tag = 'input window, operand 0, single buffered']
    #allocation3 [shape = 's32[2]{0}', space=sflag, size = 0x8, scoped, tag = 'scoped memory for tpu_custom_call.1']
    #allocation4 [shape = 's32[2]{0}', space=sflag, size = 0x8, scoped, tag = 'scoped memory for tpu_custom_call.1']
    #allocation5 [shape = 's32[2]{0}', space=sflag, size = 0x8, scoped, tag = 'scoped memory for tpu_custom_call.1']
    #allocation6 [shape = 'u8[512]{0}', space=smem, size = 0x200, scoped, tag = 'input window, operand 1, single buffered']
    #allocation7 [shape = 's32[1]{0}', space=sflag, size = 0x4, scoped, tag = 'scoped memory for tpu_custom_call.1']
    #allocation8 [shape = 'u8[16384]{0}', space=vmem, size = 0x4000, scoped, tag = 'input window, operand 2']
    #allocation9 [shape = 'u8[1024]{0}', space=vmem, size = 0x400, scoped, tag = 'output window, operand 0']
    %9 = vsyncpa [#allocation5], 0
    %10 = vsyncpa [#allocation7], 0
    %11 = vsyncpa [#allocation3], 0
    %s12 = scalar_lea.sflag [#allocation3], 1
    %13 = vsyncpa %s12, 0
    %14 = vsyncpa [#allocation4], 0
    %s15 = scalar_lea.sflag [#allocation4], 1
    %16 = vsyncpa %s15, 0
    loop: start=0, step=1, limit=5
    $region2: #{tpu_custom_call.1} parent=1 // loop_pre_header
      _
    $region3: #{tpu_custom_call.1} parent=1 // loop_header
      %s18 = sphi 0, %s22
      %p19 = scmp.ge.s32.totalorder %s18, 5
      %s26 = sphi 0, %s26
      %s28 = sphi 0, %s26
      %s29 = sphi 0, %s28
      %s43 = sphi 0, %s29
      %s47 = sphi 0, %s47
      %s49 = sphi 0, %s47
      %s50 = sphi 0, %s49
      %s64 = sphi 0, %s50
      %s70 = sphi 0, %s72
      %s73 = sphi 0, %s70
      %s74 = sphi 0, %s73
      %s90 = sphi 0, %s74
      %s94 = sphi 0, %s94
      %s96 = sphi 0, %s94
      %s97 = sphi 0, %s96
      %s111 = sphi 0, %s97
      %s117 = sphi 0, %s119
      %s120 = sphi 0, %s117
      %s121 = sphi 0, %s120
      %s137 = sphi 0, %s121
    $region4: #{tpu_custom_call.1} parent=1 // loop_header_branch
      %21 = sbr.rel (%p19) target = $region8
    $region5: #{tpu_custom_call.1} parent=1 // loop_body
      %s23 = ssub.s32 %s18, 1
      %s24 = ssub.s32 %s18, 2
      %s25 = sadd.s32 %s18, 1
      %s27 = sadd.s32 %s26, 1
      %p30 = scmp.eq.s32.totalorder %s18, 2
      %p31 = scmp.ne.s32.totalorder %s26, %s28
      %p32 = scmp.eq.s32.totalorder %s18, 0
      %p33 = por %p31, %p32
      %p34 = scmp.ne.s32.totalorder %s26, %s28
      %p35 = scmp.eq.s32.totalorder %s23, 2
      %p36 = por %p34, %p35
      %p37 = scmp.ne.s32.totalorder %s28, %s29
      %p38 = scmp.eq.s32.totalorder %s23, 0
      %p39 = por %p37, %p38
      %p40 = scmp.ne.s32.totalorder %s28, %s29
      %p41 = scmp.eq.s32.totalorder %s24, 2
      %p42 = por %p40, %p41
      %p44 = scmp.ne.s32.totalorder %s29, %s43
      %p45 = scmp.eq.s32.totalorder %s24, 0
      %p46 = por %p44, %p45
      %s48 = sadd.s32 %s47, 1
      %p51 = scmp.eq.s32.totalorder %s18, 2
      %p52 = scmp.ne.s32.totalorder %s47, %s49
      %p53 = scmp.eq.s32.totalorder %s18, 0
      %p54 = por %p52, %p53
      %p55 = scmp.ne.s32.totalorder %s47, %s49
      %p56 = scmp.eq.s32.totalorder %s23, 2
      %p57 = por %p55, %p56
      %p58 = scmp.ne.s32.totalorder %s49, %s50
      %p59 = scmp.eq.s32.totalorder %s23, 0
      %p60 = por %p58, %p59
      %p61 = scmp.ne.s32.totalorder %s49, %s50
      %p62 = scmp.eq.s32.totalorder %s24, 2
      %p63 = por %p61, %p62
      %p65 = scmp.ne.s32.totalorder %s50, %s64
      %p66 = scmp.eq.s32.totalorder %s24, 0
      %p67 = por %p65, %p66
      %s68 = ssub.s32 %s18, %s25
      %p69 = scmp.eq.s32.totalorder %s68, 0
      %s71 = sadd.s32 %s70, 1
      %s72 = scalar_select %p69, %s70, %s71
      %p75 = pneg %p69
      %p76 = scmp.eq.s32.totalorder %s18, 2
      %p77 = por %p75, %p76
      %p78 = scmp.ne.s32.totalorder %s70, %s73
      %p79 = scmp.eq.s32.totalorder %s18, 0
      %p80 = por %p78, %p79
      %p81 = scmp.ne.s32.totalorder %s70, %s73
      %p82 = scmp.eq.s32.totalorder %s23, 2
      %p83 = por %p81, %p82
      %p84 = scmp.ne.s32.totalorder %s73, %s74
      %p85 = scmp.eq.s32.totalorder %s23, 0
      %p86 = por %p84, %p85
      %p87 = scmp.ne.s32.totalorder %s73, %s74
      %p88 = scmp.eq.s32.totalorder %s24, 2
      %p89 = por %p87, %p88
      %p91 = scmp.ne.s32.totalorder %s74, %s90
      %p92 = scmp.eq.s32.totalorder %s24, 0
      %p93 = por %p91, %p92
      %s95 = sadd.s32 %s94, 1
      %p98 = scmp.eq.s32.totalorder %s18, 2
      %p99 = scmp.ne.s32.totalorder %s94, %s96
      %p100 = scmp.eq.s32.totalorder %s18, 0
      %p101 = por %p99, %p100
      %p102 = scmp.ne.s32.totalorder %s94, %s96
      %p103 = scmp.eq.s32.totalorder %s23, 2
      %p104 = por %p102, %p103
      %p105 = scmp.ne.s32.totalorder %s96, %s97
      %p106 = scmp.eq.s32.totalorder %s23, 0
      %p107 = por %p105, %p106
      %p108 = scmp.ne.s32.totalorder %s96, %s97
      %p109 = scmp.eq.s32.totalorder %s24, 2
      %p110 = por %p108, %p109
      %p112 = scmp.ne.s32.totalorder %s97, %s111
      %p113 = scmp.eq.s32.totalorder %s24, 0
      %p114 = por %p112, %p113
      %s115 = ssub.s32 %s18, %s25
      %p116 = scmp.eq.s32.totalorder %s115, 0
      %s118 = sadd.s32 %s117, 1
      %s119 = scalar_select %p116, %s117, %s118
      %p122 = pneg %p116
      %p123 = scmp.eq.s32.totalorder %s18, 2
      %p124 = por %p122, %p123
      %p125 = scmp.ne.s32.totalorder %s117, %s120
      %p126 = scmp.eq.s32.totalorder %s18, 0
      %p127 = por %p125, %p126
      %p128 = scmp.ne.s32.totalorder %s117, %s120
      %p129 = scmp.eq.s32.totalorder %s23, 2
      %p130 = por %p128, %p129
      %p131 = scmp.ne.s32.totalorder %s120, %s121
      %p132 = scmp.eq.s32.totalorder %s23, 0
      %p133 = por %p131, %p132
      %p134 = scmp.ne.s32.totalorder %s120, %s121
      %p135 = scmp.eq.s32.totalorder %s24, 2
      %p136 = por %p134, %p135
      %p138 = scmp.ne.s32.totalorder %s121, %s137
      %p139 = scmp.eq.s32.totalorder %s24, 0
      %p140 = por %p138, %p139
      %p141 = scmp.le.s32.totalorder 1, %s18
      %p142 = scmp.lt.s32.totalorder %s18, 4
      %p143 = pnand %p141, %p142
      %p144 = pneg %p143
      // Predicated region
      $region9: #{tpu_custom_call.1} parent=5 // pred_check
        _
      $region10: #{tpu_custom_call.1} parent=5 // pred_check_branch
        %146 = sbr.rel (%p143) target = $region12
      $region11: #{tpu_custom_call.1} parent=5 // pred_region
        %s147 = ssub.s32 %s18, 1
        // Predicated region
        $region13: #{tpu_custom_call.1} parent=11 // pred_check
          %p148 = pneg %p39
        $region14: #{tpu_custom_call.1} parent=11 // pred_check_branch
          %150 = sbr.rel (%p148) target = $region16
        $region15: #{tpu_custom_call.1} parent=11 // pred_region
          %s152 = ssub.s32 16, 16
          %153 = vsyncadd [#allocation5], %s152
          %s155 = sshll.u32 %s0, 4
          %s156 = int_to_ptr.vmem [resolvable:$true] %s155
          %158 = dma.vmem_to_smem %s156, 16, [#allocation2], [#allocation5]
        $region16: #{tpu_custom_call.1} parent=11 // pred_fallthru
          _
        // Predicated region
        $region17: #{tpu_custom_call.1} parent=11 // pred_check
          %p159 = pneg %p60
        $region18: #{tpu_custom_call.1} parent=11 // pred_check_branch
          %161 = sbr.rel (%p159) target = $region20
        $region19: #{tpu_custom_call.1} parent=11 // pred_region
          %s163 = ssub.s32 16, 16
          %164 = vsyncadd [#allocation7], %s163
          %s166 = sshll.u32 %s1, 4
          %s167 = int_to_ptr.vmem [resolvable:$true] %s166
          %169 = dma.vmem_to_smem %s167, 16, [#allocation6], [#allocation7]
        $region20: #{tpu_custom_call.1} parent=11 // pred_fallthru
          _
        // Predicated region
        $region21: #{tpu_custom_call.1} parent=11 // pred_check
          %p170 = pneg %p107
        $region22: #{tpu_custom_call.1} parent=11 // pred_check_branch
          %172 = sbr.rel (%p170) target = $region24
        $region23: #{tpu_custom_call.1} parent=11 // pred_region
          _
        $region24: #{tpu_custom_call.1} parent=11 // pred_fallthru
          _
      $region12: #{tpu_custom_call.1} parent=5 // pred_fallthru
        _
      %p173 = scmp.lt.s32.totalorder %s18, 3
      // Predicated region
      $region25: #{tpu_custom_call.1} parent=5 // pred_check
        %p174 = pneg %p173
      $region26: #{tpu_custom_call.1} parent=5 // pred_check_branch
        %176 = sbr.rel (%p174) target = $region28
      $region27: #{tpu_custom_call.1} parent=5 // pred_region
        // Predicated region
        $region29: #{tpu_custom_call.1} parent=27 // pred_check
          %p177 = pneg %p80
        $region30: #{tpu_custom_call.1} parent=27 // pred_check_branch
          %179 = sbr.rel (%p177) target = $region32
        $region31: #{tpu_custom_call.1} parent=27 // pred_region
          %s180 = sand.u32 %s70, 1
          %s181 = scalar_lea.sflag [#allocation3], %s180
          %s182 = sand.u32 %s70, 1
          %s183 = smul.addr %s182, 16
          %s184 = scalar_lea.vmem [#allocation8], %s183
          %s186 = ssub.s32 256, 256
          %187 = vsyncadd %s181, %s186
          %s188 = smul.addr %s18, 128
          %s189 = scalar_lea.hbm %s2, %s188
          %s190 = sshll.u32 %s184, 4
          %s191 = int_to_ptr.vmem [resolvable:$true] %s190
          %196 = dma.hbm_to_vmem [thread:$0]  %s189, 256, %s191, %s181, 384, 128, 8
        $region32: #{tpu_custom_call.1} parent=27 // pred_fallthru
          _
      $region28: #{tpu_custom_call.1} parent=5 // pred_fallthru
        _
      %p197 = scmp.le.s32.totalorder 1, %s18
      %p198 = scmp.lt.s32.totalorder %s18, 4
      %p199 = pnand %p197, %p198
      %p200 = pneg %p199
      // Predicated region
      $region33: #{tpu_custom_call.1} parent=5 // pred_check
        _
      $region34: #{tpu_custom_call.1} parent=5 // pred_check_branch
        %202 = sbr.rel (%p199) target = $region36
      $region35: #{tpu_custom_call.1} parent=5 // pred_region
        %s203 = ssub.s32 %s18, 1
        // Predicated region
        $region37: #{tpu_custom_call.1} parent=35 // pred_check
          %p204 = pneg %p39
        $region38: #{tpu_custom_call.1} parent=35 // pred_check_branch
          %206 = sbr.rel (%p204) target = $region40
        $region39: #{tpu_custom_call.1} parent=35 // pred_region
          %207 = dma.done [#allocation5], 16
        $region40: #{tpu_custom_call.1} parent=35 // pred_fallthru
          _
        // Predicated region
        $region41: #{tpu_custom_call.1} parent=35 // pred_check
          %p208 = pneg %p60
        $region42: #{tpu_custom_call.1} parent=35 // pred_check_branch
          %210 = sbr.rel (%p208) target = $region44
        $region43: #{tpu_custom_call.1} parent=35 // pred_region
          %211 = dma.done [#allocation7], 16
        $region44: #{tpu_custom_call.1} parent=35 // pred_fallthru
          _
        %s212 = sand.u32 %s73, 1
        %s213 = scalar_lea.sflag [#allocation3], %s212
        %s214 = sand.u32 %s73, 1
        %s215 = smul.addr %s214, 16
        %s216 = scalar_lea.vmem [#allocation8], %s215
        // Predicated region
        $region45: #{tpu_custom_call.1} parent=35 // pred_check
          %p217 = pneg %p86
        $region46: #{tpu_custom_call.1} parent=35 // pred_check_branch
          %219 = sbr.rel (%p217) target = $region48
        $region47: #{tpu_custom_call.1} parent=35 // pred_region
          %220 = dma.done %s213, 256
        $region48: #{tpu_custom_call.1} parent=35 // pred_fallthru
          _
        %221 = sfence
        %p222 = pneg %p39
        %p223 = pneg %p36
        %p224 = pneg %p60
        %p225 = pneg %p57
        %s226 = sand.u32 %s73, 1
        %s227 = scalar_lea.sflag [#allocation3], %s226
        %s228 = sand.u32 %s73, 1
        %s229 = smul.addr %s228, 16
        %s230 = scalar_lea.vmem [#allocation8], %s229
        %p231 = pneg %p86
        %p232 = pneg %p83
        %p233 = pneg %p107
        %p234 = pneg %p104
        %p235 = pneg %p133
        %p236 = pneg %p130
        %s237 = sand.u32 %s120, 1
        %s238 = scalar_lea.sflag [#allocation4], %s237
        %s239 = sand.u32 %s120, 1
        %s240 = scalar_lea.vmem [#allocation9], %s239
        %v241 = vld [vmem:[%s216] sm:$0xff]
        %v242 = vld [vmem:[%s216 + $0x8] sm:$0xff]
        %v243 = vld [vmem:[%s3] sm:$0xff]
        %v244 = vld [vmem:[%s3 + $0x8] sm:$0xff]
        %s245 = sld [smem:[#allocation2]]
        %s246 = sld [smem:[#allocation6]]
        %248 = vset.pattern.permute.xlu0 0
        %249 = vperm.xlu0 %248, %v243
        %v250 = vpop.permute.xlu0 %249
        %253 = vset.pattern.permute.xlu0 0
        %254 = vperm.xlu0 %253, %v244
        %v255 = vpop.permute.xlu0 %254
        %v257 = vsub.f32 %v241, %v250
        %v258 = vsub.f32 %v242, %v255
        %v259 = vmul.f32 %v257, %v257
        %v260 = vmul.f32 %v258, %v258
        %v261 = vadd.f32 %v259, %v260
        %v262 = vrot.slane %v261, 4
        %v263 = vadd.f32 %v261, %v262
        %v264 = vrot.slane %v263, 2
        %v265 = vadd.f32 %v263, %v264
        %v266 = vrot.slane %v265, 1
        %v267 = vadd.f32 %v265, %v266
        %v268 = vrsqrt.pop %v267
        %v269 = vmul.f32 %v267, %v268
        %vm270 = vcmp.eq.f32.partialorder %v267, inf
        %v271 = vsel %vm270, %v267, %v269
        %vm272 = vcmp.eq.f32.partialorder %v267, 0.0
        %v273 = vand.u32 %v267, 2147483648
        %v274 = vsel %vm272, %v273, %v271
        %v275 = vstv %s245
        %v276 = vadd.f32 %v275, %v274
        %v277 = vrcp.pop %v276
        %v278 = vstv %s246
        %v279 = vmul.f32 %v278, %v277
        %v280 = vmul.f32 %v279, %v257
        %v281 = vmul.f32 %v279, %v258
        %v282 = vadd.f32 %v241, %v280
        %v283 = vadd.f32 %v242, %v281
        %v284 = vadd.f32 %v279, 1.0
        %v285 = vlog2.pop %v284
        %v286 = vmul.f32 %v285, 0.6931472
        %v287 = vmul.f32 %v286, 15.0
        %v288 = vadd.f32 %v287, 0.0
        %s289 = smul.f32 %s245, %s246
        %v290 = vstv %s289
        %v291 = vmul.f32 %v290, %v277
        %v292 = vmul.f32 %v291, %v277
        %v293 = vadd.f32 %v292, 1.0
        %v294 = vlog2.pop %v293
        %v295 = vmul.f32 %v294, 0.6931472
        %v296 = vadd.f32 %v288, %v295
        %s297 = sld [smem:[#allocation2 + $0x1]]
        %s298 = sld [smem:[#allocation6 + $0x1]]
        %299 = vset.pattern.permute.xlu0 1
        %300 = vperm.xlu0 %299, %v243
        %v301 = vpop.permute.xlu0 %300
        %303 = vset.pattern.permute.xlu0 1
        %304 = vperm.xlu0 %303, %v244
        %v305 = vpop.permute.xlu0 %304
        %v307 = vsub.f32 %v282, %v301
        %v308 = vsub.f32 %v283, %v305
        %v309 = vmul.f32 %v307, %v307
        %v310 = vmul.f32 %v308, %v308
        %v311 = vadd.f32 %v309, %v310
        %v312 = vrot.slane %v311, 4
        %v313 = vadd.f32 %v311, %v312
        %v314 = vrot.slane %v313, 2
        %v315 = vadd.f32 %v313, %v314
        %v316 = vrot.slane %v315, 1
        %v317 = vadd.f32 %v315, %v316
        %v318 = vrsqrt.pop %v317
        %v319 = vmul.f32 %v317, %v318
        %vm320 = vcmp.eq.f32.partialorder %v317, inf
        %v321 = vsel %vm320, %v317, %v319
        %vm322 = vcmp.eq.f32.partialorder %v317, 0.0
        %v323 = vand.u32 %v317, 2147483648
        %v324 = vsel %vm322, %v323, %v321
        %v325 = vstv %s297
        %v326 = vadd.f32 %v325, %v324
        %v327 = vrcp.pop %v326
        %v328 = vstv %s298
        %v329 = vmul.f32 %v328, %v327
        %v330 = vmul.f32 %v329, %v307
        %v331 = vmul.f32 %v329, %v308
        %v332 = vadd.f32 %v282, %v330
        %v333 = vadd.f32 %v283, %v331
        %v334 = vadd.f32 %v329, 1.0
        %v335 = vlog2.pop %v334
        %v336 = vmul.f32 %v335, 0.6931472
        %v337 = vmul.f32 %v336, 15.0
        %v338 = vadd.f32 %v296, %v337
        %s339 = smul.f32 %s297, %s298
        %v340 = vstv %s339
        %v341 = vmul.f32 %v340, %v327
        %v342 = vmul.f32 %v341, %v327
        %v343 = vadd.f32 %v342, 1.0
        %v344 = vlog2.pop %v343
        %v345 = vmul.f32 %v344, 0.6931472
        %v346 = vadd.f32 %v338, %v345
        %s347 = sld [smem:[#allocation2 + $0x2]]
        %s348 = sld [smem:[#allocation6 + $0x2]]
        %349 = vset.pattern.permute.xlu0 2
        %350 = vperm.xlu0 %349, %v243
        %v351 = vpop.permute.xlu0 %350
        %353 = vset.pattern.permute.xlu0 2
        %354 = vperm.xlu0 %353, %v244
        %v355 = vpop.permute.xlu0 %354
        %v357 = vsub.f32 %v332, %v351
        %v358 = vsub.f32 %v333, %v355
        %v359 = vmul.f32 %v357, %v357
        %v360 = vmul.f32 %v358, %v358
        %v361 = vadd.f32 %v359, %v360
        %v362 = vrot.slane %v361, 4
        %v363 = vadd.f32 %v361, %v362
        %v364 = vrot.slane %v363, 2
        %v365 = vadd.f32 %v363, %v364
        %v366 = vrot.slane %v365, 1
        %v367 = vadd.f32 %v365, %v366
        %v368 = vrsqrt.pop %v367
        %v369 = vmul.f32 %v367, %v368
        %vm370 = vcmp.eq.f32.partialorder %v367, inf
        %v371 = vsel %vm370, %v367, %v369
        %vm372 = vcmp.eq.f32.partialorder %v367, 0.0
        %v373 = vand.u32 %v367, 2147483648
        %v374 = vsel %vm372, %v373, %v371
        %v375 = vstv %s347
        %v376 = vadd.f32 %v375, %v374
        %v377 = vrcp.pop %v376
        %v378 = vstv %s348
        %v379 = vmul.f32 %v378, %v377
        %v380 = vmul.f32 %v379, %v357
        %v381 = vmul.f32 %v379, %v358
        %v382 = vadd.f32 %v332, %v380
        %v383 = vadd.f32 %v333, %v381
        %v384 = vadd.f32 %v379, 1.0
        %v385 = vlog2.pop %v384
        %v386 = vmul.f32 %v385, 0.6931472
        %v387 = vmul.f32 %v386, 15.0
        %v388 = vadd.f32 %v346, %v387
        %s389 = smul.f32 %s347, %s348
        %v390 = vstv %s389
        %v391 = vmul.f32 %v390, %v377
        %v392 = vmul.f32 %v391, %v377
        %v393 = vadd.f32 %v392, 1.0
        %v394 = vlog2.pop %v393
        %v395 = vmul.f32 %v394, 0.6931472
        %v396 = vadd.f32 %v388, %v395
        %s397 = sld [smem:[#allocation2 + $0x3]]
        %s398 = sld [smem:[#allocation6 + $0x3]]
        %399 = vset.pattern.permute.xlu0 3
        %400 = vperm.xlu0 %399, %v243
        %v401 = vpop.permute.xlu0 %400
        %403 = vset.pattern.permute.xlu0 3
        %404 = vperm.xlu0 %403, %v244
        %v405 = vpop.permute.xlu0 %404
        %v407 = vsub.f32 %v382, %v401
        %v408 = vsub.f32 %v383, %v405
        %v409 = vmul.f32 %v407, %v407
        %v410 = vmul.f32 %v408, %v408
        %v411 = vadd.f32 %v409, %v410
        %v412 = vrot.slane %v411, 4
        %v413 = vadd.f32 %v411, %v412
        %v414 = vrot.slane %v413, 2
        %v415 = vadd.f32 %v413, %v414
        %v416 = vrot.slane %v415, 1
        %v417 = vadd.f32 %v415, %v416
        %v418 = vrsqrt.pop %v417
        %v419 = vmul.f32 %v417, %v418
        %vm420 = vcmp.eq.f32.partialorder %v417, inf
        %v421 = vsel %vm420, %v417, %v419
        %vm422 = vcmp.eq.f32.partialorder %v417, 0.0
        %v423 = vand.u32 %v417, 2147483648
        %v424 = vsel %vm422, %v423, %v421
        %v425 = vstv %s397
        %v426 = vadd.f32 %v425, %v424
        %v427 = vrcp.pop %v426
        %v428 = vstv %s398
        %v429 = vmul.f32 %v428, %v427
        %v430 = vmul.f32 %v429, %v407
        %v431 = vmul.f32 %v429, %v408
        %v432 = vadd.f32 %v382, %v430
        %v433 = vadd.f32 %v383, %v431
        %v434 = vadd.f32 %v429, 1.0
        %v435 = vlog2.pop %v434
        %v436 = vmul.f32 %v435, 0.6931472
        %v437 = vmul.f32 %v436, 15.0
        %v438 = vadd.f32 %v396, %v437
        %s439 = smul.f32 %s397, %s398
        %v440 = vstv %s439
        %v441 = vmul.f32 %v440, %v427
        %v442 = vmul.f32 %v441, %v427
        %v443 = vadd.f32 %v442, 1.0
        %v444 = vlog2.pop %v443
        %v445 = vmul.f32 %v444, 0.6931472
        %v446 = vadd.f32 %v438, %v445
        %v447 = vmul.f32 %v432, %v432
        %v448 = vmul.f32 %v433, %v433
        %v449 = vadd.f32 %v447, %v448
        %v450 = vrot.slane %v449, 4
        %v451 = vadd.f32 %v449, %v450
        %v452 = vrot.slane %v451, 2
        %v453 = vadd.f32 %v451, %v452
        %v454 = vrot.slane %v453, 1
        %v455 = vadd.f32 %v453, %v454
        %v456 = vadd.f32 %v455, 29.406033
        %v457 = vmul.f32 %v456, -0.5
        %v458 = vadd.f32 %v457, %v446
        %459 = vst [vmem:[%s240] sm:$0x1] %v458
        %s460 = sand.u32 %s120, 1
        %s461 = scalar_lea.sflag [#allocation4], %s460
        %s462 = sand.u32 %s120, 1
        %s463 = scalar_lea.vmem [#allocation9], %s462
        // Predicated region
        $region49: #{tpu_custom_call.1} parent=35 // pred_check
          %p464 = pneg %p130
        $region50: #{tpu_custom_call.1} parent=35 // pred_check_branch
          %466 = sbr.rel (%p464) target = $region52
        $region51: #{tpu_custom_call.1} parent=35 // pred_region
          %s468 = ssub.s32 16, 16
          %469 = vsyncadd %s461, %s468
          %s470 = smul.addr %s23, 16
          %s471 = scalar_lea.hbm %s4, %s470
          %s473 = sshll.u32 %s463, 4
          %s474 = int_to_ptr.vmem [resolvable:$true] %s473
          %476 = dma.vmem_to_hbm [thread:$0]  %s474, 16, %s471, %s461
        $region52: #{tpu_custom_call.1} parent=35 // pred_fallthru
          _
      $region36: #{tpu_custom_call.1} parent=5 // pred_fallthru
        _
      %p477 = scmp.le.s32.totalorder 2, %s18
      // Predicated region
      $region53: #{tpu_custom_call.1} parent=5 // pred_check
        %p478 = pneg %p477
      $region54: #{tpu_custom_call.1} parent=5 // pred_check_branch
        %480 = sbr.rel (%p478) target = $region56
      $region55: #{tpu_custom_call.1} parent=5 // pred_region
        %s481 = ssub.s32 %s18, 2
        // Predicated region
        $region57: #{tpu_custom_call.1} parent=55 // pred_check
          %p482 = pneg %p136
        $region58: #{tpu_custom_call.1} parent=55 // pred_check_branch
          %484 = sbr.rel (%p482) target = $region60
        $region59: #{tpu_custom_call.1} parent=55 // pred_region
          %s485 = sand.u32 %s121, 1
          %s486 = scalar_lea.sflag [#allocation4], %s485
          %s487 = sand.u32 %s121, 1
          %s488 = scalar_lea.vmem [#allocation9], %s487
          %489 = dma.done %s486, 16
        $region60: #{tpu_custom_call.1} parent=55 // pred_fallthru
          _
      $region56: #{tpu_custom_call.1} parent=5 // pred_fallthru
        _
    $region6: #{tpu_custom_call.1} parent=1 // loop_footer
      %s22 = sadd.s32 1, %s18
    $region7: #{tpu_custom_call.1} parent=1 // loop_footer_branch
      %17 = sbr.rel target = $region3
    $region8: #{tpu_custom_call.1} parent=1 // loop_exit
      _
    %490 = vsyncpa [#allocation3], 1
    %s491 = scalar_lea.sflag [#allocation3], 1
    %492 = vsyncpa %s491, 1
    %493 = vsyncpa [#allocation4], 1
    %s494 = scalar_lea.sflag [#allocation4], 1
    %495 = vsyncpa %s494, 1
    %496 = vsyncpa [#allocation5], 1
    %s497 = scalar_lea.sflag [#allocation5], 1
    %498 = vsyncpa %s497, 1
    %499 = vsyncpa [#allocation7], 1

</llo_original>
